<compile_context>
chip_gen: v7x
topology: tpu7x:2x2x1
jax: 0.10.0
libtpu: 0.0.40
codegen_flags: <defaults>
</compile_context>

<pallas_src>
import jax
import jax.numpy as jnp
from jax.experimental import pallas as pl
from jax.experimental.pallas import tpu as pltpu

_EPS = 1e-5
_LANES = 128


def _round_up(x, m):
    return (x + m - 1) // m * m


def _vmem_capacity_bytes():
    """Best-effort per-core VMEM capacity; conservative fallback if unknown."""
    try:
        info = pltpu.get_tpu_info()
        cap = getattr(info, "vmem_capacity_bytes", None)
        if cap:
            return int(cap)
    except Exception:
        pass
    return 64 * 1024 * 1024  # v7x-sized conservative default


def _pick_hw_tile(HW, K, vmem_cap):
    """Lane-dense tile over HW = Ho*Wo.

    The [K, T] bf16 patches block is sized to a per-generation VMEM budget
    (~8 MiB on 128-MiB-VMEM chips, ~4 MiB on 64-MiB v7x) so the ~0.35 us
    per-grid-step overhead is amortized.
    """
    hwp_min = _round_up(max(HW, 1), _LANES)
    budget = min(8 << 20, max(2 << 20, vmem_cap // 16))
    t = budget // (2 * max(K, 1))            # bf16 = 2 bytes/element
    t = max(_LANES, (t // _LANES) * _LANES)
    return min(t, hwp_min)


def _make_phase1_kernel(Cin, Cc, HW, HW_TILE, with_pool, needs_mask):
    """conv(+pool) pre-activation (bf16 store) + per-image sum / sumsq (f32)."""

    def kernel(patches_ref, w_ref, b_ref, pre_ref, stats_ref):
        j = pl.program_id(1)

        @pl.when(j == 0)
        def _init():
            stats_ref[...] = jnp.zeros_like(stats_ref)

        p = patches_ref[...]                                     # [K, T] bf16
        # stride-2 3x3 conv as one MXU matmul: bf16 inputs, f32 accumulation.
        conv = jnp.dot(w_ref[...], p,
                       preferred_element_type=jnp.float32) + b_ref[...]  # [Cc,T] f32

        if with_pool:
            # 2x2 / stride-2 max-pool taps == im2col taps 4, 5, 7, 8.
            tap = lambda t: p[t * Cin:(t + 1) * Cin, :]
            pooled = jnp.maximum(jnp.maximum(tap(4), tap(5)),
                                 jnp.maximum(tap(7), tap(8)))    # [Cin, T] bf16
            pre = jnp.concatenate([conv, pooled.astype(jnp.float32)], axis=0)
        else:
            pre = conv                                           # [Cout, T] f32

        pre_ref[...] = pre.astype(pre_ref.dtype)                 # bf16 lane-dense store

        if needs_mask:
            col = jax.lax.broadcasted_iota(jnp.int32, (1, HW_TILE), 1) + j * HW_TILE
            prem = jnp.where(col < HW, pre, 0.0)
        else:
            prem = pre
        s1 = jnp.sum(prem, axis=1, keepdims=True)                # [Cout, 1] f32
        s2 = jnp.sum(prem * pre, axis=1, keepdims=True)          # masked sum of squares
        # Resident per-image accumulator (broadcast over 128 lanes).
        stats_ref[...] = stats_ref[...] + jnp.concatenate([s1, s2], axis=0)

    return kernel


def _bn_relu_kernel(pre_ref, scale_ref, shift_ref, o_ref):
    # folded BatchNorm (per-channel scale/shift) + ReLU; bf16 in, f32 compute/out.
    x = pre_ref[...].astype(jnp.float32)
    o_ref[...] = jnp.maximum(x * scale_ref[...] + shift_ref[...], 0.0)


def _im2col_taps(x, Ho, Wo):
    """x: [N, Cin, H, W] -> [N, 9*Cin, Ho*Wo] tap-major patches (3x3/s2/p1)."""
    N, Cin = x.shape[0], x.shape[1]
    xp = jnp.pad(x, ((0, 0), (0, 0), (1, 1), (1, 1)))
    cols = []
    for kh in range(3):
        for kw in range(3):
            cols.append(xp[:, :, kh:kh + 2 * Ho:2, kw:kw + 2 * Wo:2])  # [N,Cin,Ho,Wo]
    p = jnp.stack(cols, axis=1)                    # [N, 9, Cin, Ho, Wo]
    return p.reshape(N, 9 * Cin, Ho * Wo)


@jax.jit
def downsampler_block(x, conv_w, conv_b, gamma, beta):
    """x: [N, Cin, H, W] (NCHW) -> [N, Cout, H//2, W//2] (NCHW)."""
    N, Cin, H, W = x.shape
    Ho, Wo = H // 2, W // 2
    HW = Ho * Wo
    M = N * HW
    Cc = conv_w.shape[0]
    Cout = gamma.shape[0]
    with_pool = Cin < Cout
    K = 9 * Cin

    vmem_cap = _vmem_capacity_bytes()
    HW_TILE = _pick_hw_tile(HW, K, vmem_cap)
    HWp = _round_up(HW, HW_TILE)
    n_tiles = HWp // HW_TILE
    needs_mask = HWp != HW

    # im2col in bf16 (the MXU input precision) -- K on sublanes, HW on lanes.
    # TODO(synk): move this gather into phase 1 (manual DMA of input row slabs
    # + 1-row halo) to remove the XLA-materialized [N, K, HWp] stream.
    patches = _im2col_taps(x.astype(jnp.bfloat16), Ho, Wo)      # [N, K, HW] bf16
    if needs_mask:
        patches = jnp.pad(patches, ((0, 0), (0, 0), (0, HWp - HW)))

    w_mat = jnp.transpose(conv_w, (0, 2, 3, 1)).reshape(Cc, K).astype(jnp.bfloat16)
    b_mat = conv_b.reshape(Cc, 1).astype(jnp.float32)

    # Explicit scoped-VMEM budget covering double-buffered blocks + temporaries.
    vmem_need = (2 * K * HW_TILE * 2 + 2 * Cout * HW_TILE * 2
                 + 2 * (Cc * K * 2 + Cc * 4) + 2 * 2 * Cout * _LANES * 4
                 + (Cc + Cout) * HW_TILE * 4 + (1 << 21))
    vmem_limit = int(min(max(2 * vmem_need, 32 << 20), int(vmem_cap * 0.9)))

    # ---- phase 1: pre-activation [N, Cout, HWp] bf16 + per-image stats ------
    phase1 = _make_phase1_kernel(Cin, Cc, HW, HW_TILE, with_pool, needs_mask)
    pre, stats = pl.pallas_call(
        phase1,
        out_shape=(jax.ShapeDtypeStruct((N, Cout, HWp), jnp.bfloat16),
                   jax.ShapeDtypeStruct((N, 2 * Cout, _LANES), jnp.float32)),
        grid=(N, n_tiles),
        in_specs=[pl.BlockSpec((None, K, HW_TILE), lambda n, j: (n, 0, j)),
                  pl.BlockSpec((Cc, K), lambda n, j: (0, 0)),
                  pl.BlockSpec((Cc, 1), lambda n, j: (0, 0))],
        out_specs=(pl.BlockSpec((None, Cout, HW_TILE), lambda n, j: (n, 0, j)),
                   pl.BlockSpec((None, 2 * Cout, _LANES), lambda n, j: (n, 0, 0))),
        compiler_params=pltpu.CompilerParams(
            dimension_semantics=("parallel", "arbitrary"),
            vmem_limit_bytes=vmem_limit),
    )(patches, w_mat, b_mat)

    # ---- training-mode BatchNorm: fold batch stats into scale/shift ---------
    sums = jnp.sum(stats[:, :Cout, 0], axis=0)                   # [Cout]
    sumsq = jnp.sum(stats[:, Cout:, 0], axis=0)                  # [Cout]
    mean = sums / M
    var = jnp.maximum(sumsq / M - mean * mean, 0.0)              # biased variance
    scale = gamma.astype(jnp.float32) * jax.lax.rsqrt(var + _EPS)
    shift = beta.astype(jnp.float32) - mean * scale

    # ---- phase 2: normalize + ReLU, output already in NC(HW) layout ---------
    out = pl.pallas_call(
        _bn_relu_kernel,
        out_shape=jax.ShapeDtypeStruct((N, Cout, HWp), jnp.float32),
        grid=(N, n_tiles),
        in_specs=[pl.BlockSpec((None, Cout, HW_TILE), lambda n, j: (n, 0, j)),
                  pl.BlockSpec((Cout, 1), lambda n, j: (0, 0)),
                  pl.BlockSpec((Cout, 1), lambda n, j: (0, 0))],
        out_specs=pl.BlockSpec((None, Cout, HW_TILE), lambda n, j: (n, 0, j)),
        compiler_params=pltpu.CompilerParams(
            dimension_semantics=("parallel", "parallel"),
            vmem_limit_bytes=vmem_limit),
    )(pre, scale.reshape(Cout, 1), shift.reshape(Cout, 1))

    if needs_mask:
        out = out[:, :, :HW]
    return out.reshape(N, Cout, Ho, Wo)                          # NCHW, no transpose


def _reference(x, conv_w, conv_b, gamma, beta):
    """Pure-JAX reference mirroring the PyTorch forward (training-mode BN)."""
    Cin = x.shape[1]
    Cout = gamma.shape[0]
    conv = jax.lax.conv_general_dilated(
        x, conv_w, window_strides=(2, 2), padding=((1, 1), (1, 1)),
        dimension_numbers=("NCHW", "OIHW", "NCHW"),
        precision=jax.lax.Precision.HIGHEST)
    conv = conv + conv_b.reshape(1, -1, 1, 1)
    if Cin < Cout:
        pooled = jax.lax.reduce_window(
            x, -jnp.inf, jax.lax.max, (1, 1, 2, 2), (1, 1, 2, 2), "VALID")
        pre = jnp.concatenate([conv, pooled], axis=1)
    else:
        pre = conv
    mean = jnp.mean(pre, axis=(0, 2, 3), keepdims=True)
    var = jnp.mean((pre - mean) ** 2, axis=(0, 2, 3), keepdims=True)
    y = (pre - mean) * jax.lax.rsqrt(var + _EPS)
    y = y * gamma.reshape(1, -1, 1, 1) + beta.reshape(1, -1, 1, 1)
    return jnp.maximum(y, 0.0)


if __name__ == "__main__":
    key = jax.random.PRNGKey(0)

    def run_case(ninput, noutput, key, N=2, H=16, W=16):
        Cc = noutput - ninput if ninput < noutput else noutput
        kx, kw, kb, kg, kbt = jax.random.split(key, 5)
        x = jax.random.normal(kx, (N, ninput, H, W), dtype=jnp.float32)
        conv_w = 0.1 * jax.random.normal(kw, (Cc, ninput, 3, 3), dtype=jnp.float32)
        conv_b = 0.1 * jax.random.normal(kb, (Cc,), dtype=jnp.float32)
        gamma = 1.0 + 0.1 * jax.random.normal(kg, (noutput,), dtype=jnp.float32)
        beta = 0.1 * jax.random.normal(kbt, (noutput,), dtype=jnp.float32)

        out = jax.block_until_ready(
            downsampler_block(x, conv_w, conv_b, gamma, beta))
        assert out.shape == (N, noutput, H // 2, W // 2), out.shape

        ref = jax.block_until_ready(_reference(x, conv_w, conv_b, gamma, beta))
        # Kernel runs the matmul with bf16 inputs and stores the intermediate
        # pre-activation in bf16 (f32 accumulation / statistics), so compare at
        # bf16-level tolerance against the f32 HIGHEST-precision reference.
        err = jnp.max(jnp.abs(out - ref))
        assert jnp.allclose(out, ref, rtol=2e-2, atol=5e-2), \
            f"mismatch vs reference ({ninput}->{noutput}): max abs err {err}"

    k1, k2 = jax.random.split(key)
    run_case(4, 8, k1)   # ninput < noutput: conv || 2x2 max-pool, concat
    run_case(8, 8, k2)   # ninput >= noutput: conv only
    print("KERNEL_OK")
</pallas_src>

<mosaic_0001>
module attributes {stable_mosaic.version = 11 : i64} {
  func.func @_bn_relu_kernel(%arg0: i32, %arg1: i32, %arg2: memref<1x8x128xbf16, #tpu.memory_space<vmem>>, %arg3: memref<8x1xf32, #tpu.memory_space<vmem>>, %arg4: memref<8x1xf32, #tpu.memory_space<vmem>>, %arg5: memref<1x8x128xf32, #tpu.memory_space<vmem>>) attributes {dimension_semantics = [#tpu.dimension_semantics<parallel>, #tpu.dimension_semantics<parallel>], iteration_bounds = array<i64: 2, 1>, scalar_prefetch = 0 : i64, scratch_operands = 0 : i64, tpu.core_type = #tpu.core_type<tc>, window_params = [{transform_indices = @transform_0, window_bounds = array<i64: 1, 8, 128>}, {pipeline_mode = #tpu.pipeline_mode<synchronous>, transform_indices = @transform_1, window_bounds = array<i64: 8, 1>}, {pipeline_mode = #tpu.pipeline_mode<synchronous>, transform_indices = @transform_2, window_bounds = array<i64: 8, 1>}, {transform_indices = @transform_3, window_bounds = array<i64: 1, 8, 128>}]} {
    %c0 = arith.constant 0 : index
    %c0_0 = arith.constant 0 : index
    %c0_1 = arith.constant 0 : index
    %0 = vector.load %arg2[%c0, %c0_0, %c0_1] : memref<1x8x128xbf16, #tpu.memory_space<vmem>>, vector<1x8x128xbf16>
    %1 = vector.shape_cast %0 : vector<1x8x128xbf16> to vector<8x128xbf16>
    %2 = arith.extf %1 : vector<8x128xbf16> to vector<8x128xf32>
    %c0_2 = arith.constant 0 : index
    %c0_3 = arith.constant 0 : index
    %3 = vector.load %arg3[%c0_2, %c0_3] : memref<8x1xf32, #tpu.memory_space<vmem>>, vector<8x1xf32>
    %4 = vector.broadcast %3 : vector<8x1xf32> to vector<8x128xf32>
    %5 = arith.mulf %2, %4 : vector<8x128xf32>
    %c0_4 = arith.constant 0 : index
    %c0_5 = arith.constant 0 : index
    %6 = vector.load %arg4[%c0_4, %c0_5] : memref<8x1xf32, #tpu.memory_space<vmem>>, vector<8x1xf32>
    %7 = vector.broadcast %6 : vector<8x1xf32> to vector<8x128xf32>
    %8 = arith.addf %5, %7 : vector<8x128xf32>
    %cst = arith.constant 0.000000e+00 : f32
    %9 = vector.broadcast %cst : f32 to vector<8x128xf32>
    %10 = arith.maximumf %8, %9 : vector<8x128xf32>
    %c0_6 = arith.constant 0 : index
    %c0_7 = arith.constant 0 : index
    %c0_8 = arith.constant 0 : index
    %11 = vector.load %arg5[%c0_6, %c0_7, %c0_8] : memref<1x8x128xf32, #tpu.memory_space<vmem>>, vector<1x8x128xf32>
    %12 = vector.shape_cast %11 : vector<1x8x128xf32> to vector<8x128xf32>
    %13 = vector.shape_cast %10 : vector<8x128xf32> to vector<1x8x128xf32>
    tpu.vector_store %arg5[%c0_6, %c0_7, %c0_8], %13 {strides = array<i32>} : memref<1x8x128xf32, #tpu.memory_space<vmem>>, vector<1x8x128xf32>,
    return
  }
  func.func @transform_0(%arg0: i32, %arg1: i32) -> (i32, i32, i32) {
    %c0_i32 = arith.constant 0 : i32
    %c0_i32_0 = arith.constant 0 : i32
    return %arg0, %c0_i32, %arg1 : i32, i32, i32
  }
  func.func @transform_1(%arg0: i32, %arg1: i32) -> (i32, i32) {
    %c0_i32 = arith.constant 0 : i32
    %c0_i32_0 = arith.constant 0 : i32
    %c0_i32_1 = arith.constant 0 : i32
    return %c0_i32, %c0_i32_0 : i32, i32
  }
  func.func @transform_2(%arg0: i32, %arg1: i32) -> (i32, i32) {
    %c0_i32 = arith.constant 0 : i32
    %c0_i32_0 = arith.constant 0 : i32
    %c0_i32_1 = arith.constant 0 : i32
    return %c0_i32, %c0_i32_0 : i32, i32
  }
  func.func @transform_3(%arg0: i32, %arg1: i32) -> (i32, i32, i32) {
    %c0_i32 = arith.constant 0 : i32
    %c0_i32_0 = arith.constant 0 : i32
    return %arg0, %c0_i32, %arg1 : i32, i32, i32
  }
}

module attributes {stable_mosaic.version = 11 : i64} {
  func.func @kernel(%arg0: i32, %arg1: i32, %arg2: memref<1x36x128xbf16, #tpu.memory_space<vmem>>, %arg3: memref<4x36xbf16, #tpu.memory_space<vmem>>, %arg4: memref<4x1xf32, #tpu.memory_space<vmem>>, %arg5: memref<1x8x128xbf16, #tpu.memory_space<vmem>>, %arg6: memref<1x16x128xf32, #tpu.memory_space<vmem>>) attributes {dimension_semantics = [#tpu.dimension_semantics<parallel>, #tpu.dimension_semantics<arbitrary>], iteration_bounds = array<i64: 2, 1>, scalar_prefetch = 0 : i64, scratch_operands = 0 : i64, tpu.core_type = #tpu.core_type<tc>, window_params = [{transform_indices = @transform_0, window_bounds = array<i64: 1, 36, 128>}, {pipeline_mode = #tpu.pipeline_mode<synchronous>, transform_indices = @transform_1, window_bounds = array<i64: 4, 36>}, {pipeline_mode = #tpu.pipeline_mode<synchronous>, transform_indices = @transform_2, window_bounds = array<i64: 4, 1>}, {transform_indices = @transform_3, window_bounds = array<i64: 1, 8, 128>}, {transform_indices = @transform_4, window_bounds = array<i64: 1, 16, 128>}]} {
    %c0_i32 = arith.constant 0 : i32
    %0 = arith.cmpi eq, %arg1, %c0_i32 : i32
    %1 = arith.extui %0 : i1 to i32
    %c0_i32_0 = arith.constant 0 : i32
    %2 = arith.cmpi ne, %1, %c0_i32_0 : i32
    scf.if %2 {
      %cst_19 = arith.constant 0.000000e+00 : f32
      %46 = vector.broadcast %cst_19 : f32 to vector<16x128xf32>
      %c0_20 = arith.constant 0 : index
      %c0_21 = arith.constant 0 : index
      %c0_22 = arith.constant 0 : index
      %47 = vector.load %arg6[%c0_20, %c0_21, %c0_22] : memref<1x16x128xf32, #tpu.memory_space<vmem>>, vector<1x16x128xf32>
      %48 = vector.shape_cast %47 : vector<1x16x128xf32> to vector<16x128xf32>
      %49 = vector.shape_cast %46 : vector<16x128xf32> to vector<1x16x128xf32>
      tpu.vector_store %arg6[%c0_20, %c0_21, %c0_22], %49 {strides = array<i32>} : memref<1x16x128xf32, #tpu.memory_space<vmem>>, vector<1x16x128xf32>,
    } else {
    }
    %c0 = arith.constant 0 : index
    %c0_1 = arith.constant 0 : index
    %c0_2 = arith.constant 0 : index
    %3 = vector.load %arg2[%c0, %c0_1, %c0_2] : memref<1x36x128xbf16, #tpu.memory_space<vmem>>, vector<1x36x128xbf16>
    %4 = vector.shape_cast %3 : vector<1x36x128xbf16> to vector<36x128xbf16>
    %c0_3 = arith.constant 0 : index
    %c0_4 = arith.constant 0 : index
    %5 = vector.load %arg3[%c0_3, %c0_4] : memref<4x36xbf16, #tpu.memory_space<vmem>>, vector<4x36xbf16>
    %cst = arith.constant dense<0.000000e+00> : vector<4x128xf32>
    %6 = tpu.matmul %5, %4, %cst {dimension_numbers = #tpu.dot_dimension_numbers<[1], [0], [0], [1], [0, 0, 1, 1], [], []>} : vector<4x36xbf16>, vector<36x128xbf16>, vector<4x128xf32> -> vector<4x128xf32>
    %c0_5 = arith.constant 0 : index
    %c0_6 = arith.constant 0 : index
    %7 = vector.load %arg4[%c0_5, %c0_6] : memref<4x1xf32, #tpu.memory_space<vmem>>, vector<4x1xf32>
    %8 = vector.broadcast %7 : vector<4x1xf32> to vector<4x128xf32>
    %9 = arith.addf %6, %8 : vector<4x128xf32>
    %10 = vector.extract_strided_slice %4 {offsets = [16, 0], sizes = [4, 128], strides = [1, 1]} : vector<36x128xbf16> to vector<4x128xbf16>
    %11 = vector.extract_strided_slice %4 {offsets = [20, 0], sizes = [4, 128], strides = [1, 1]} : vector<36x128xbf16> to vector<4x128xbf16>
    %12 = arith.maximumf %10, %11 : vector<4x128xbf16>
    %13 = vector.extract_strided_slice %4 {offsets = [28, 0], sizes = [4, 128], strides = [1, 1]} : vector<36x128xbf16> to vector<4x128xbf16>
    %14 = vector.extract_strided_slice %4 {offsets = [32, 0], sizes = [4, 128], strides = [1, 1]} : vector<36x128xbf16> to vector<4x128xbf16>
    %15 = arith.maximumf %13, %14 : vector<4x128xbf16>
    %16 = arith.maximumf %12, %15 : vector<4x128xbf16>
    %17 = arith.extf %16 : vector<4x128xbf16> to vector<4x128xf32>
    %18 = tpu.concatenate %9, %17 in 0 : vector<4x128xf32>, vector<4x128xf32> -> vector<8x128xf32>
    %19 = arith.truncf %18 : vector<8x128xf32> to vector<8x128xbf16>
    %c0_7 = arith.constant 0 : index
    %c0_8 = arith.constant 0 : index
    %c0_9 = arith.constant 0 : index
    %20 = vector.load %arg5[%c0_7, %c0_8, %c0_9] : memref<1x8x128xbf16, #tpu.memory_space<vmem>>, vector<1x8x128xbf16>
    %21 = vector.shape_cast %20 : vector<1x8x128xbf16> to vector<8x128xbf16>
    %22 = vector.shape_cast %19 : vector<8x128xbf16> to vector<1x8x128xbf16>
    tpu.vector_store %arg5[%c0_7, %c0_8, %c0_9], %22 {strides = array<i32>} : memref<1x8x128xbf16, #tpu.memory_space<vmem>>, vector<1x8x128xbf16>,
    %23 = tpu.iota {dimensions = array<i32: 1>} : vector<1x128xi32>
    %c128_i32 = arith.constant 128 : i32
    %24 = arith.muli %arg1, %c128_i32 : i32
    %25 = vector.broadcast %24 : i32 to vector<1x128xi32>
    %26 = arith.addi %23, %25 : vector<1x128xi32>
    %c64_i32 = arith.constant 64 : i32
    %27 = vector.broadcast %c64_i32 : i32 to vector<1x128xi32>
    %28 = arith.cmpi slt, %26, %27 : vector<1x128xi32>
    %cst_10 = arith.constant 0.000000e+00 : f32
    %29 = vector.shape_cast %28 : vector<1x128xi1> to vector<1x128xi1>
    %30 = vector.broadcast %29 : vector<1x128xi1> to vector<8x128xi1>
    %31 = vector.broadcast %cst_10 : f32 to vector<8x128xf32>
    %32 = arith.select %30, %18, %31 : vector<8x128xi1>, vector<8x128xf32>
    %cst_11 = arith.constant dense<0.000000e+00> : vector<8xf32>
    %33 = vector.multi_reduction <add>, %32, %cst_11 [1] : vector<8x128xf32> to vector<8xf32>
    %34 = vector.shape_cast %33 : vector<8xf32> to vector<8x1xf32>
    %35 = arith.mulf %32, %18 : vector<8x128xf32>
    %cst_12 = arith.constant dense<0.000000e+00> : vector<8xf32>
    %36 = vector.multi_reduction <add>, %35, %cst_12 [1] : vector<8x128xf32> to vector<8xf32>
    %37 = vector.shape_cast %36 : vector<8xf32> to vector<8x1xf32>
    %c0_13 = arith.constant 0 : index
    %c0_14 = arith.constant 0 : index
    %c0_15 = arith.constant 0 : index
    %38 = vector.load %arg6[%c0_13, %c0_14, %c0_15] : memref<1x16x128xf32, #tpu.memory_space<vmem>>, vector<1x16x128xf32>
    %39 = vector.shape_cast %38 : vector<1x16x128xf32> to vector<16x128xf32>
    %40 = tpu.concatenate %34, %37 in 0 : vector<8x1xf32>, vector<8x1xf32> -> vector<16x1xf32>
    %41 = vector.broadcast %40 : vector<16x1xf32> to vector<16x128xf32>
    %42 = arith.addf %39, %41 : vector<16x128xf32>
    %c0_16 = arith.constant 0 : index
    %c0_17 = arith.constant 0 : index
    %c0_18 = arith.constant 0 : index
    %43 = vector.load %arg6[%c0_16, %c0_17, %c0_18] : memref<1x16x128xf32, #tpu.memory_space<vmem>>, vector<1x16x128xf32>
    %44 = vector.shape_cast %43 : vector<1x16x128xf32> to vector<16x128xf32>
    %45 = vector.shape_cast %42 : vector<16x128xf32> to vector<1x16x128xf32>
    tpu.vector_store %arg6[%c0_16, %c0_17, %c0_18], %45 {strides = array<i32>} : memref<1x16x128xf32, #tpu.memory_space<vmem>>, vector<1x16x128xf32>,
    return
  }
  func.func @transform_0(%arg0: i32, %arg1: i32) -> (i32, i32, i32) {
    %c0_i32 = arith.constant 0 : i32
    %c0_i32_0 = arith.constant 0 : i32
    return %arg0, %c0_i32, %arg1 : i32, i32, i32
  }
  func.func @transform_1(%arg0: i32, %arg1: i32) -> (i32, i32) {
    %c0_i32 = arith.constant 0 : i32
    %c0_i32_0 = arith.constant 0 : i32
    %c0_i32_1 = arith.constant 0 : i32
    return %c0_i32, %c0_i32_0 : i32, i32
  }
  func.func @transform_2(%arg0: i32, %arg1: i32) -> (i32, i32) {
    %c0_i32 = arith.constant 0 : i32
    %c0_i32_0 = arith.constant 0 : i32
    %c0_i32_1 = arith.constant 0 : i32
    return %c0_i32, %c0_i32_0 : i32, i32
  }
  func.func @transform_3(%arg0: i32, %arg1: i32) -> (i32, i32, i32) {
    %c0_i32 = arith.constant 0 : i32
    %c0_i32_0 = arith.constant 0 : i32
    return %arg0, %c0_i32, %arg1 : i32, i32, i32
  }
  func.func @transform_4(%arg0: i32, %arg1: i32) -> (i32, i32, i32) {
    %c0_i32 = arith.constant 0 : i32
    %c0_i32_0 = arith.constant 0 : i32
    %c0_i32_1 = arith.constant 0 : i32
    return %arg0, %c0_i32, %c0_i32_0 : i32, i32, i32
  }
}

</mosaic_0001>

<llo_original>
// kernel: downsampler_block.2
$region0: #{downsampler_block.2}
  #allocation0 [shape = 'u32[]', space=smem, size = 0x4, offset = 0x4, fixed_abs, tag = 'smem constant byte address 0x4 - core index']
  #allocation1 [shape = 'u32[144,128]{1,0:T(1,128)}', space=vmem, size = 0x12000, scoped, tag = 'internal scratch']
  %s0 = inlined_call_operand.vmem [shape: bf16[2,36,128], index: 0, kind: input, shape index: {}]
  %s1 = inlined_call_operand.vmem [shape: bf16[4,36], index: 1, kind: input, shape index: {}]
  %s2 = inlined_call_operand.vmem [shape: f32[4,1], index: 2, kind: input, shape index: {}]
  %s3 = inlined_call_operand.vmem [shape: bf16[2,8,128], index: 3, kind: output, shape index: {0}]
  %s4 = inlined_call_operand.vmem [shape: f32[2,16,128], index: 4, kind: output, shape index: {1}]
  %5 = xla_tuple %s3, %s4
  %s6 = sld [smem:[#allocation0]]
  $region57: #{downsampler_block.2} parent=0
    _
  %s8 = ssub.s32 1, %s6
  %s9 = scalar_select 0, %s8, %s6
  loop: start=0, step=1, limit=4
  $region2: #{downsampler_block.2} parent=0 // loop_pre_header
    _
  $region3: #{downsampler_block.2} parent=0 // loop_header
    %s11 = sphi 0, %s15
    %p12 = scmp.ge.s32.totalorder %s11, 4
    %s18 = sphi 0, %s30
    %s19 = sphi 0, %s26
    %s20 = sphi 0, %s18
    %s21 = sphi 0, %s19
    %s22 = sphi 0, %s20
    %s23 = sphi 0, %s21
    %s35 = sphi 0, %s37
    %s38 = sphi 0, %s35
    %s39 = sphi 0, %s38
    %s55 = sphi 0, %s39
    %s59 = sphi 0, %s59
    %s61 = sphi 0, %s59
    %s62 = sphi 0, %s61
    %s76 = sphi 0, %s62
    %s80 = sphi 0, %s80
    %s82 = sphi 0, %s80
    %s83 = sphi 0, %s82
    %s97 = sphi 0, %s83
    %s105 = sphi 0, %s107
    %s108 = sphi 0, %s105
    %s109 = sphi 0, %s108
    %s125 = sphi 0, %s109
    %s131 = sphi 0, %s133
    %s134 = sphi 0, %s131
    %s135 = sphi 0, %s134
    %s151 = sphi 0, %s135
  $region4: #{downsampler_block.2} parent=0 // loop_header_branch
    %14 = sbr.rel (%p12) target = $region8
  $region5: #{downsampler_block.2} parent=0 // loop_body
    %s16 = ssub.s32 %s11, 1
    %s17 = ssub.s32 %s11, 2
    %s24 = sadd.s32 1, %s19
    %p25 = scmp.ge.s32.totalorder %s24, 1
    %s26 = scalar_select %p25, 0, %s24
    %s27 = sadd.s32 1, %s18
    %s28 = scalar_select %p25, %s27, %s18
    %p29 = scmp.ge.s32.totalorder %s28, 2
    %s30 = scalar_select %p29, 0, %s28
    %s31 = ssub.s32 %s18, %s30
    %s32 = ssub.s32 %s19, %s26
    %s33 = sor.u32 %s31, %s32
    %p34 = scmp.eq.s32.totalorder %s33, 0
    %s36 = sadd.s32 %s35, 1
    %s37 = scalar_select %p34, %s35, %s36
    %p40 = pneg %p34
    %p41 = scmp.eq.s32.totalorder %s11, 1
    %p42 = por %p40, %p41
    %p43 = scmp.ne.s32.totalorder %s35, %s38
    %p44 = scmp.eq.s32.totalorder %s11, 0
    %p45 = por %p43, %p44
    %p46 = scmp.ne.s32.totalorder %s35, %s38
    %p47 = scmp.eq.s32.totalorder %s16, 1
    %p48 = por %p46, %p47
    %p49 = scmp.ne.s32.totalorder %s38, %s39
    %p50 = scmp.eq.s32.totalorder %s16, 0
    %p51 = por %p49, %p50
    %p52 = scmp.ne.s32.totalorder %s38, %s39
    %p53 = scmp.eq.s32.totalorder %s17, 1
    %p54 = por %p52, %p53
    %p56 = scmp.ne.s32.totalorder %s39, %s55
    %p57 = scmp.eq.s32.totalorder %s17, 0
    %p58 = por %p56, %p57
    %s60 = sadd.s32 %s59, 1
    %p63 = scmp.eq.s32.totalorder %s11, 1
    %p64 = scmp.ne.s32.totalorder %s59, %s61
    %p65 = scmp.eq.s32.totalorder %s11, 0
    %p66 = por %p64, %p65
    %p67 = scmp.ne.s32.totalorder %s59, %s61
    %p68 = scmp.eq.s32.totalorder %s16, 1
    %p69 = por %p67, %p68
    %p70 = scmp.ne.s32.totalorder %s61, %s62
    %p71 = scmp.eq.s32.totalorder %s16, 0
    %p72 = por %p70, %p71
    %p73 = scmp.ne.s32.totalorder %s61, %s62
    %p74 = scmp.eq.s32.totalorder %s17, 1
    %p75 = por %p73, %p74
    %p77 = scmp.ne.s32.totalorder %s62, %s76
    %p78 = scmp.eq.s32.totalorder %s17, 0
    %p79 = por %p77, %p78
    %s81 = sadd.s32 %s80, 1
    %p84 = scmp.eq.s32.totalorder %s11, 1
    %p85 = scmp.ne.s32.totalorder %s80, %s82
    %p86 = scmp.eq.s32.totalorder %s11, 0
    %p87 = por %p85, %p86
    %p88 = scmp.ne.s32.totalorder %s80, %s82
    %p89 = scmp.eq.s32.totalorder %s16, 1
    %p90 = por %p88, %p89
    %p91 = scmp.ne.s32.totalorder %s82, %s83
    %p92 = scmp.eq.s32.totalorder %s16, 0
    %p93 = por %p91, %p92
    %p94 = scmp.ne.s32.totalorder %s82, %s83
    %p95 = scmp.eq.s32.totalorder %s17, 1
    %p96 = por %p94, %p95
    %p98 = scmp.ne.s32.totalorder %s83, %s97
    %p99 = scmp.eq.s32.totalorder %s17, 0
    %p100 = por %p98, %p99
    %s101 = ssub.s32 %s18, %s30
    %s102 = ssub.s32 %s19, %s26
    %s103 = sor.u32 %s101, %s102
    %p104 = scmp.eq.s32.totalorder %s103, 0
    %s106 = sadd.s32 %s105, 1
    %s107 = scalar_select %p104, %s105, %s106
    %p110 = pneg %p104
    %p111 = scmp.eq.s32.totalorder %s11, 1
    %p112 = por %p110, %p111
    %p113 = scmp.ne.s32.totalorder %s105, %s108
    %p114 = scmp.eq.s32.totalorder %s11, 0
    %p115 = por %p113, %p114
    %p116 = scmp.ne.s32.totalorder %s105, %s108
    %p117 = scmp.eq.s32.totalorder %s16, 1
    %p118 = por %p116, %p117
    %p119 = scmp.ne.s32.totalorder %s108, %s109
    %p120 = scmp.eq.s32.totalorder %s16, 0
    %p121 = por %p119, %p120
    %p122 = scmp.ne.s32.totalorder %s108, %s109
    %p123 = scmp.eq.s32.totalorder %s17, 1
    %p124 = por %p122, %p123
    %p126 = scmp.ne.s32.totalorder %s109, %s125
    %p127 = scmp.eq.s32.totalorder %s17, 0
    %p128 = por %p126, %p127
    %s129 = ssub.s32 %s18, %s30
    %p130 = scmp.eq.s32.totalorder %s129, 0
    %s132 = sadd.s32 %s131, 1
    %s133 = scalar_select %p130, %s131, %s132
    %p136 = pneg %p130
    %p137 = scmp.eq.s32.totalorder %s11, 1
    %p138 = por %p136, %p137
    %p139 = scmp.ne.s32.totalorder %s131, %s134
    %p140 = scmp.eq.s32.totalorder %s11, 0
    %p141 = por %p139, %p140
    %p142 = scmp.ne.s32.totalorder %s131, %s134
    %p143 = scmp.eq.s32.totalorder %s16, 1
    %p144 = por %p142, %p143
    %p145 = scmp.ne.s32.totalorder %s134, %s135
    %p146 = scmp.eq.s32.totalorder %s16, 0
    %p147 = por %p145, %p146
    %p148 = scmp.ne.s32.totalorder %s134, %s135
    %p149 = scmp.eq.s32.totalorder %s17, 1
    %p150 = por %p148, %p149
    %p152 = scmp.ne.s32.totalorder %s135, %s151
    %p153 = scmp.eq.s32.totalorder %s17, 0
    %p154 = por %p152, %p153
    %p155 = scmp.le.s32.totalorder 1, %s11
    %p156 = scmp.lt.s32.totalorder %s11, 3
    %p157 = pnand %p155, %p156
    %p158 = pneg %p157
    // Predicated region
    $region9: #{downsampler_block.2} parent=5 // pred_check
      _
    $region10: #{downsampler_block.2} parent=5 // pred_check_branch
      %160 = sbr.rel (%p157) target = $region12
    $region11: #{downsampler_block.2} parent=5 // pred_region
      %s161 = ssub.s32 %s11, 1
      // Predicated region
      $region13: #{downsampler_block.2} parent=11 // pred_check
        %p162 = pneg %p72
      $region14: #{downsampler_block.2} parent=11 // pred_check_branch
        %164 = sbr.rel (%p162) target = $region16
      $region15: #{downsampler_block.2} parent=11 // pred_region
        _
      $region16: #{downsampler_block.2} parent=11 // pred_fallthru
        _
      // Predicated region
      $region17: #{downsampler_block.2} parent=11 // pred_check
        %p165 = pneg %p93
      $region18: #{downsampler_block.2} parent=11 // pred_check_branch
        %167 = sbr.rel (%p165) target = $region20
      $region19: #{downsampler_block.2} parent=11 // pred_region
        _
      $region20: #{downsampler_block.2} parent=11 // pred_fallthru
        _
    $region12: #{downsampler_block.2} parent=5 // pred_fallthru
      _
    %p168 = scmp.lt.s32.totalorder %s11, 2
    // Predicated region
    $region21: #{downsampler_block.2} parent=5 // pred_check
      %p169 = pneg %p168
    $region22: #{downsampler_block.2} parent=5 // pred_check_branch
      %171 = sbr.rel (%p169) target = $region24
    $region23: #{downsampler_block.2} parent=5 // pred_region
      // Predicated region
      $region25: #{downsampler_block.2} parent=23 // pred_check
        %p172 = pneg %p45
      $region26: #{downsampler_block.2} parent=23 // pred_check_branch
        %174 = sbr.rel (%p172) target = $region28
      $region27: #{downsampler_block.2} parent=23 // pred_region
        %p175 = scmp.lt.s32.totalorder %s18, 1
        %s176 = scalar_select %p175, %s18, 1
        %p177 = scmp.lt.s32.totalorder %s19, 0
        %s178 = scalar_select %p177, %s19, 0
        %s179 = smul.addr %s176, 5
        %s180 = sadd.s32 %s178, %s179
        %s181 = smul.addr %s180, 4
        %s182 = scalar_lea.vmem %s0, %s181
      $region28: #{downsampler_block.2} parent=23 // pred_fallthru
        _
    $region24: #{downsampler_block.2} parent=5 // pred_fallthru
      _
    %p183 = scmp.le.s32.totalorder 1, %s11
    %p184 = scmp.lt.s32.totalorder %s11, 3
    %p185 = pnand %p183, %p184
    %p186 = pneg %p185
    // Predicated region
    $region29: #{downsampler_block.2} parent=5 // pred_check
      _
    $region30: #{downsampler_block.2} parent=5 // pred_check_branch
      %188 = sbr.rel (%p185) target = $region32
    $region31: #{downsampler_block.2} parent=5 // pred_region
      %s189 = ssub.s32 %s11, 1
      %p190 = scmp.lt.s32.totalorder %s20, 1
      %s191 = scalar_select %p190, %s20, 1
      %p192 = scmp.lt.s32.totalorder %s21, 0
      %s193 = scalar_select %p192, %s21, 0
      %s194 = smul.addr %s191, 5
      %s195 = sadd.s32 %s193, %s194
      %s196 = smul.addr %s195, 4
      %s197 = scalar_lea.vmem %s0, %s196
      %p198 = pneg %p51
      %p199 = pneg %p48
      %p200 = pneg %p72
      %p201 = pneg %p69
      %p202 = pneg %p93
      %p203 = pneg %p90
      %p204 = pneg %p121
      %p205 = pneg %p118
      %p206 = scmp.lt.s32.totalorder %s20, 1
      %s207 = scalar_select %p206, %s20, 1
      %p208 = scmp.lt.s32.totalorder %s21, 0
      %s209 = scalar_select %p208, %s21, 0
      %s210 = sadd.s32 %s209, %s207
      %s211 = smul.addr %s210, 4
      %s212 = scalar_lea.vmem %s3, %s211
      %p213 = pneg %p147
      %p214 = pneg %p144
      %p215 = scmp.lt.s32.totalorder %s20, 1
      %s216 = scalar_select %p215, %s20, 1
      %s217 = smul.addr %s216, 2
      %s218 = smul.addr %s217, 8
      %s219 = scalar_lea.vmem %s4, %s218
      %p220 = scmp.lt.s32.totalorder %s20, 1
      %s221 = scalar_select %p220, %s20, 1
      %p222 = scmp.lt.s32.totalorder %s21, 0
      %s223 = scalar_select %p222, %s21, 0
      %s224 = smul.addr %s221, 5
      %s225 = sadd.s32 %s223, %s224
      %s226 = smul.addr %s225, 4
      %s227 = scalar_lea.vmem %s0, %s226
      %p228 = scmp.lt.s32.totalorder %s20, 1
      %s229 = scalar_select %p228, %s20, 1
      %p230 = scmp.lt.s32.totalorder %s21, 0
      %s231 = scalar_select %p230, %s21, 0
      %s232 = sadd.s32 %s231, %s229
      %s233 = smul.addr %s232, 4
      %s234 = scalar_lea.vmem %s3, %s233
      %p235 = scmp.lt.s32.totalorder %s20, 1
      %s236 = scalar_select %p235, %s20, 1
      %s237 = smul.addr %s236, 2
      %s238 = smul.addr %s237, 8
      %s239 = scalar_lea.vmem %s4, %s238
      %p241 = scmp.eq.s32.totalorder %s21, 0
      // Predicated region
      $region33: #{downsampler_block.2} parent=31 // pred_check
        %p242 = pneg %p241
      $region34: #{downsampler_block.2} parent=31 // pred_check_branch
        %244 = sbr.rel (%p242) target = $region36
      $region35: #{downsampler_block.2} parent=31 // pred_region
        %245 = vst [vmem:[%s239] sm:$0xff] 0.0
        %246 = vst [vmem:[%s239 + $0x8] sm:$0xff] 0.0
      $region36: #{downsampler_block.2} parent=31 // pred_fallthru
        _
      %v247 = vld [vmem:[%s227] sm:$0xf]
      %v248 = vld [vmem:[%s227 + $0x4] sm:$0xf]
      %v249 = vld [vmem:[%s227 + $0x8] sm:$0xf]
      %v250 = vld [vmem:[%s227 + $0xc] sm:$0xf]
      %v251 = vld [vmem:[%s227 + $0x10] sm:$0x3]
      %v252 = vld [vmem:[%s1] sm:$0x3]
      %v253 = vld [vmem:[%s2] sm:$0xf]
      %255 = vset.pattern.permute.xlu0 0
      %256 = vperm.xlu0 %255, %v253
      %v257 = vpop.permute.xlu0 %256
      %v264 = vunpack.c.l.b16 %v247
      %v265 = vunpack.c.l.b16 %v248
      %v266 = vunpack.c.l.b16 %v249
      %v267 = vunpack.c.l.b16 %v250
      %v268 = vunpack.c.l.b16 %v251
      %v269 = vpack.c.b16 %v265, %v264
      %v270 = vpack.c.b16 %v267, %v266
      %v271 = vpack.c.b16 %v268, %v268
      %vm274 = vcmask 293888
      %v276 = vsel %vm274, %v252, 0
      %vm278 = vcmask 1041408
      %v280 = vsel %vm278, %v271, 0
      %282 = vmatprep.subr.bf16.mxu0 0
      %283 = vmatpush1.bf16.msra.mxu0 %v269
      %284 = vmatprep.subr.bf16.mxu0 0
      %285 = vmatpush1.bf16.msra.mxu0 %v270
      %286 = vmatprep.subr.bf16.mxu0 0
      %287 = vmatpush1.bf16.msra.mxu0 %v280
      %288 = vmatprep.subr.bf16.mxu0 0
      %289 = vmatpush1.bf16.msra.mxu0 0
      %290 = vmatprep.subr.bf16.mxu0 0
      %291 = vmatpush1.bf16.msra.mxu0 0
      %292 = vmatprep.subr.bf16.mxu0 0
      %293 = vmatpush1.bf16.msra.mxu0 0
      %294 = vmatprep.subr.bf16.mxu0 0
      %295 = vmatpush1.bf16.msra.mxu0 0
      %296 = vmatprep.subr.bf16.mxu0 0
      %297 = vmatpush1.bf16.msra.mxu0 0
      %298 = vmatprep.subr.bf16.mxu0 0
      %299 = vmatpush1.bf16.msra.mxu0 0
      %300 = vmatprep.subr.bf16.mxu0 0
      %301 = vmatpush1.bf16.msra.mxu0 0
      %302 = vmatprep.subr.bf16.mxu0 0
      %303 = vmatpush1.bf16.msra.mxu0 0
      %304 = vmatprep.subr.bf16.mxu0 0
      %305 = vmatpush1.bf16.msra.mxu0 0
      %306 = vmatprep.subr.bf16.mxu0 0
      %307 = vmatpush1.bf16.msra.mxu0 0
      %308 = vmatprep.subr.bf16.mxu0 0
      %309 = vmatpush1.bf16.msra.mxu0 0
      %310 = vmatprep.subr.bf16.mxu0 0
      %311 = vmatpush1.bf16.msra.mxu0 0
      %312 = vmatprep.subr.bf16.mxu0 0
      %313 = vmatpush1.bf16.msra.mxu0 0
      %314 = vmatprep.mubr.bf16.mxu0 0
      %315 = vmatmul.mubr.bf16.gmra.mrb[0].mxu0 %v276
      %v316 = vpop.f32.mrb[0].mxu0
      %v317 = vadd.f32 %v257, %v316
      %v318 = vpop.f32.mrb[0].mxu0
      %v319 = vpop.f32.mrb[0].mxu0
      %v320 = vpop.f32.mrb[0].mxu0
      %321 = vdwg.mxu0
      %v322 = vrot.slane %v249, 6
      %v323 = vrot.slane %v322, 4
      %v325 = vmax.bf16 %v249, %v323
      %v326 = vrot.slane %v251, 6
      %v328 = vmax.bf16 %v250, %v326
      %v330 = vrot.slane %v328, 6
      %v331 = vrot.slane %v330, 4
      %v333 = vmax.bf16 %v325, %v331
      %v334 = vunpack.c.l.bf16 %v333
      %v336 = vrot.slane %v334, 4
      %vm338 = vcmask 1043456
      %v339 = vsel %vm338, %v317, %v336
      %v340 = vpack.c.bf16 %v339, %v339
      %341 = vst [vmem:[%s234] sm:$0xf] %v340
      %v342 = vlaneseq
      %v343 = vand.u32 %v342, 127
      %s344 = smul.u32 %s21, 128
      %v345 = vstv %s344
      %v346 = vadd.s32 %v343, %v345
      %vm347 = vcmp.lt.s32.totalorder %v346, 64
      %v348 = vsel %vm347, 1, 0
      %vm349 = vcmp.eq.s32.totalorder %v348, 1
      %v350 = vsel %vm349, %v339, 0.0
      %351 = vadd.xlane.f32.xlu0 %v350
      %v352 = vpop.xlane.xlu0 %351
      %v353 = vmul.f32 %v350, %v339
      %354 = vadd.xlane.f32.xlu0 %v353
      %v355 = vpop.xlane.xlu0 %354
      %v356 = vld [vmem:[%s239] sm:$0xff]
      %v357 = vld [vmem:[%s239 + $0x8] sm:$0xff]
      %359 = vset.pattern.permute.xlu0 0
      %360 = vperm.xlu0 %359, %v352
      %v361 = vpop.permute.xlu0 %360
      %364 = vset.pattern.permute.xlu0 0
      %365 = vperm.xlu0 %364, %v355
      %v366 = vpop.permute.xlu0 %365
      %v368 = vadd.f32 %v356, %v361
      %v369 = vadd.f32 %v357, %v366
      %370 = vst [vmem:[%s239] sm:$0xff] %v368
      %371 = vst [vmem:[%s239 + $0x8] sm:$0xff] %v369
      %p372 = scmp.lt.s32.totalorder %s20, 1
      %s373 = scalar_select %p372, %s20, 1
      %p374 = scmp.lt.s32.totalorder %s21, 0
      %s375 = scalar_select %p374, %s21, 0
      %s376 = sadd.s32 %s375, %s373
      %s377 = smul.addr %s376, 4
      %s378 = scalar_lea.vmem %s3, %s377
      %p379 = scmp.lt.s32.totalorder %s20, 1
      %s380 = scalar_select %p379, %s20, 1
      %s381 = smul.addr %s380, 2
      %s382 = smul.addr %s381, 8
      %s383 = scalar_lea.vmem %s4, %s382
      // Predicated region
      $region37: #{downsampler_block.2} parent=31 // pred_check
        %p384 = pneg %p118
      $region38: #{downsampler_block.2} parent=31 // pred_check_branch
        %386 = sbr.rel (%p384) target = $region40
      $region39: #{downsampler_block.2} parent=31 // pred_region
        _
      $region40: #{downsampler_block.2} parent=31 // pred_fallthru
        _
      // Predicated region
      $region41: #{downsampler_block.2} parent=31 // pred_check
        %p387 = pneg %p144
      $region42: #{downsampler_block.2} parent=31 // pred_check_branch
        %389 = sbr.rel (%p387) target = $region44
      $region43: #{downsampler_block.2} parent=31 // pred_region
        _
      $region44: #{downsampler_block.2} parent=31 // pred_fallthru
        _
    $region32: #{downsampler_block.2} parent=5 // pred_fallthru
      _
    %p390 = scmp.le.s32.totalorder 2, %s11
    // Predicated region
    $region45: #{downsampler_block.2} parent=5 // pred_check
      %p391 = pneg %p390
    $region46: #{downsampler_block.2} parent=5 // pred_check_branch
      %393 = sbr.rel (%p391) target = $region48
    $region47: #{downsampler_block.2} parent=5 // pred_region
      %s394 = ssub.s32 %s11, 2
      // Predicated region
      $region49: #{downsampler_block.2} parent=47 // pred_check
        %p395 = pneg %p124
      $region50: #{downsampler_block.2} parent=47 // pred_check_branch
        %397 = sbr.rel (%p395) target = $region52
      $region51: #{downsampler_block.2} parent=47 // pred_region
        %p398 = scmp.lt.s32.totalorder %s22, 1
        %s399 = scalar_select %p398, %s22, 1
        %p400 = scmp.lt.s32.totalorder %s23, 0
        %s401 = scalar_select %p400, %s23, 0
        %s402 = sadd.s32 %s401, %s399
        %s403 = smul.addr %s402, 4
        %s404 = scalar_lea.vmem %s3, %s403
      $region52: #{downsampler_block.2} parent=47 // pred_fallthru
        _
      // Predicated region
      $region53: #{downsampler_block.2} parent=47 // pred_check
        %p405 = pneg %p150
      $region54: #{downsampler_block.2} parent=47 // pred_check_branch
        %407 = sbr.rel (%p405) target = $region56
      $region55: #{downsampler_block.2} parent=47 // pred_region
        %p408 = scmp.lt.s32.totalorder %s22, 1
        %s409 = scalar_select %p408, %s22, 1
        %s410 = smul.addr %s409, 2
        %s411 = smul.addr %s410, 8
        %s412 = scalar_lea.vmem %s4, %s411
      $region56: #{downsampler_block.2} parent=47 // pred_fallthru
        _
    $region48: #{downsampler_block.2} parent=5 // pred_fallthru
      _
  $region6: #{downsampler_block.2} parent=0 // loop_footer
    %s15 = sadd.s32 1, %s11
  $region7: #{downsampler_block.2} parent=0 // loop_footer_branch
    %10 = sbr.rel target = $region3
  $region8: #{downsampler_block.2} parent=0 // loop_exit
    _

// kernel: downsampler_block.3
$region0: #{downsampler_block.3}
  #allocation0 [shape = 'u32[]', space=smem, size = 0x4, offset = 0x4, fixed_abs, tag = 'smem constant byte address 0x4 - core index']
  #allocation1 [shape = 'u32[144,128]{1,0:T(1,128)}', space=vmem, size = 0x12000, scoped, tag = 'internal scratch']
  %s0 = inlined_call_operand.vmem [shape: bf16[2,8,128], index: 0, kind: input, shape index: {}]
  %s1 = inlined_call_operand.vmem [shape: f32[8,1], index: 1, kind: input, shape index: {}]
  %s2 = inlined_call_operand.vmem [shape: f32[8,1], index: 2, kind: input, shape index: {}]
  %s3 = inlined_call_operand.vmem [shape: f32[2,8,128], index: 3, kind: output, shape index: {}]
  %s4 = sld [smem:[#allocation0]]
  $region45: #{downsampler_block.3} parent=0
    _
  %s6 = ssub.s32 1, %s4
  %s7 = scalar_select 0, %s6, %s4
  loop: start=0, step=1, limit=4
  $region2: #{downsampler_block.3} parent=0 // loop_pre_header
    _
  $region3: #{downsampler_block.3} parent=0 // loop_header
    %s9 = sphi 0, %s13
    %p10 = scmp.ge.s32.totalorder %s9, 4
    %s16 = sphi 0, %s28
    %s17 = sphi 0, %s24
    %s18 = sphi 0, %s16
    %s19 = sphi 0, %s17
    %s20 = sphi 0, %s18
    %s21 = sphi 0, %s19
    %s33 = sphi 0, %s35
    %s36 = sphi 0, %s33
    %s37 = sphi 0, %s36
    %s53 = sphi 0, %s37
    %s57 = sphi 0, %s57
    %s59 = sphi 0, %s57
    %s60 = sphi 0, %s59
    %s74 = sphi 0, %s60
    %s78 = sphi 0, %s78
    %s80 = sphi 0, %s78
    %s81 = sphi 0, %s80
    %s95 = sphi 0, %s81
    %s103 = sphi 0, %s105
    %s106 = sphi 0, %s103
    %s107 = sphi 0, %s106
    %s123 = sphi 0, %s107
  $region4: #{downsampler_block.3} parent=0 // loop_header_branch
    %12 = sbr.rel (%p10) target = $region8
  $region5: #{downsampler_block.3} parent=0 // loop_body
    %s14 = ssub.s32 %s9, 1
    %s15 = ssub.s32 %s9, 2
    %s22 = sadd.s32 1, %s17
    %p23 = scmp.ge.s32.totalorder %s22, 1
    %s24 = scalar_select %p23, 0, %s22
    %s25 = sadd.s32 1, %s16
    %s26 = scalar_select %p23, %s25, %s16
    %p27 = scmp.ge.s32.totalorder %s26, 2
    %s28 = scalar_select %p27, 0, %s26
    %s29 = ssub.s32 %s16, %s28
    %s30 = ssub.s32 %s17, %s24
    %s31 = sor.u32 %s29, %s30
    %p32 = scmp.eq.s32.totalorder %s31, 0
    %s34 = sadd.s32 %s33, 1
    %s35 = scalar_select %p32, %s33, %s34
    %p38 = pneg %p32
    %p39 = scmp.eq.s32.totalorder %s9, 1
    %p40 = por %p38, %p39
    %p41 = scmp.ne.s32.totalorder %s33, %s36
    %p42 = scmp.eq.s32.totalorder %s9, 0
    %p43 = por %p41, %p42
    %p44 = scmp.ne.s32.totalorder %s33, %s36
    %p45 = scmp.eq.s32.totalorder %s14, 1
    %p46 = por %p44, %p45
    %p47 = scmp.ne.s32.totalorder %s36, %s37
    %p48 = scmp.eq.s32.totalorder %s14, 0
    %p49 = por %p47, %p48
    %p50 = scmp.ne.s32.totalorder %s36, %s37
    %p51 = scmp.eq.s32.totalorder %s15, 1
    %p52 = por %p50, %p51
    %p54 = scmp.ne.s32.totalorder %s37, %s53
    %p55 = scmp.eq.s32.totalorder %s15, 0
    %p56 = por %p54, %p55
    %s58 = sadd.s32 %s57, 1
    %p61 = scmp.eq.s32.totalorder %s9, 1
    %p62 = scmp.ne.s32.totalorder %s57, %s59
    %p63 = scmp.eq.s32.totalorder %s9, 0
    %p64 = por %p62, %p63
    %p65 = scmp.ne.s32.totalorder %s57, %s59
    %p66 = scmp.eq.s32.totalorder %s14, 1
    %p67 = por %p65, %p66
    %p68 = scmp.ne.s32.totalorder %s59, %s60
    %p69 = scmp.eq.s32.totalorder %s14, 0
    %p70 = por %p68, %p69
    %p71 = scmp.ne.s32.totalorder %s59, %s60
    %p72 = scmp.eq.s32.totalorder %s15, 1
    %p73 = por %p71, %p72
    %p75 = scmp.ne.s32.totalorder %s60, %s74
    %p76 = scmp.eq.s32.totalorder %s15, 0
    %p77 = por %p75, %p76
    %s79 = sadd.s32 %s78, 1
    %p82 = scmp.eq.s32.totalorder %s9, 1
    %p83 = scmp.ne.s32.totalorder %s78, %s80
    %p84 = scmp.eq.s32.totalorder %s9, 0
    %p85 = por %p83, %p84
    %p86 = scmp.ne.s32.totalorder %s78, %s80
    %p87 = scmp.eq.s32.totalorder %s14, 1
    %p88 = por %p86, %p87
    %p89 = scmp.ne.s32.totalorder %s80, %s81
    %p90 = scmp.eq.s32.totalorder %s14, 0
    %p91 = por %p89, %p90
    %p92 = scmp.ne.s32.totalorder %s80, %s81
    %p93 = scmp.eq.s32.totalorder %s15, 1
    %p94 = por %p92, %p93
    %p96 = scmp.ne.s32.totalorder %s81, %s95
    %p97 = scmp.eq.s32.totalorder %s15, 0
    %p98 = por %p96, %p97
    %s99 = ssub.s32 %s16, %s28
    %s100 = ssub.s32 %s17, %s24
    %s101 = sor.u32 %s99, %s100
    %p102 = scmp.eq.s32.totalorder %s101, 0
    %s104 = sadd.s32 %s103, 1
    %s105 = scalar_select %p102, %s103, %s104
    %p108 = pneg %p102
    %p109 = scmp.eq.s32.totalorder %s9, 1
    %p110 = por %p108, %p109
    %p111 = scmp.ne.s32.totalorder %s103, %s106
    %p112 = scmp.eq.s32.totalorder %s9, 0
    %p113 = por %p111, %p112
    %p114 = scmp.ne.s32.totalorder %s103, %s106
    %p115 = scmp.eq.s32.totalorder %s14, 1
    %p116 = por %p114, %p115
    %p117 = scmp.ne.s32.totalorder %s106, %s107
    %p118 = scmp.eq.s32.totalorder %s14, 0
    %p119 = por %p117, %p118
    %p120 = scmp.ne.s32.totalorder %s106, %s107
    %p121 = scmp.eq.s32.totalorder %s15, 1
    %p122 = por %p120, %p121
    %p124 = scmp.ne.s32.totalorder %s107, %s123
    %p125 = scmp.eq.s32.totalorder %s15, 0
    %p126 = por %p124, %p125
    %p127 = scmp.le.s32.totalorder 1, %s9
    %p128 = scmp.lt.s32.totalorder %s9, 3
    %p129 = pnand %p127, %p128
    %p130 = pneg %p129
    // Predicated region
    $region9: #{downsampler_block.3} parent=5 // pred_check
      _
    $region10: #{downsampler_block.3} parent=5 // pred_check_branch
      %132 = sbr.rel (%p129) target = $region12
    $region11: #{downsampler_block.3} parent=5 // pred_region
      %s133 = ssub.s32 %s9, 1
      // Predicated region
      $region13: #{downsampler_block.3} parent=11 // pred_check
        %p134 = pneg %p70
      $region14: #{downsampler_block.3} parent=11 // pred_check_branch
        %136 = sbr.rel (%p134) target = $region16
      $region15: #{downsampler_block.3} parent=11 // pred_region
        _
      $region16: #{downsampler_block.3} parent=11 // pred_fallthru
        _
      // Predicated region
      $region17: #{downsampler_block.3} parent=11 // pred_check
        %p137 = pneg %p91
      $region18: #{downsampler_block.3} parent=11 // pred_check_branch
        %139 = sbr.rel (%p137) target = $region20
      $region19: #{downsampler_block.3} parent=11 // pred_region
        _
      $region20: #{downsampler_block.3} parent=11 // pred_fallthru
        _
    $region12: #{downsampler_block.3} parent=5 // pred_fallthru
      _
    %p140 = scmp.lt.s32.totalorder %s9, 2
    // Predicated region
    $region21: #{downsampler_block.3} parent=5 // pred_check
      %p141 = pneg %p140
    $region22: #{downsampler_block.3} parent=5 // pred_check_branch
      %143 = sbr.rel (%p141) target = $region24
    $region23: #{downsampler_block.3} parent=5 // pred_region
      // Predicated region
      $region25: #{downsampler_block.3} parent=23 // pred_check
        %p144 = pneg %p43
      $region26: #{downsampler_block.3} parent=23 // pred_check_branch
        %146 = sbr.rel (%p144) target = $region28
      $region27: #{downsampler_block.3} parent=23 // pred_region
        %p147 = scmp.lt.s32.totalorder %s16, 1
        %s148 = scalar_select %p147, %s16, 1
        %p149 = scmp.lt.s32.totalorder %s17, 0
        %s150 = scalar_select %p149, %s17, 0
        %s151 = sadd.s32 %s150, %s148
        %s152 = smul.addr %s151, 4
        %s153 = scalar_lea.vmem %s0, %s152
      $region28: #{downsampler_block.3} parent=23 // pred_fallthru
        _
    $region24: #{downsampler_block.3} parent=5 // pred_fallthru
      _
    %p154 = scmp.le.s32.totalorder 1, %s9
    %p155 = scmp.lt.s32.totalorder %s9, 3
    %p156 = pnand %p154, %p155
    %p157 = pneg %p156
    // Predicated region
    $region29: #{downsampler_block.3} parent=5 // pred_check
      _
    $region30: #{downsampler_block.3} parent=5 // pred_check_branch
      %159 = sbr.rel (%p156) target = $region32
    $region31: #{downsampler_block.3} parent=5 // pred_region
      %s160 = ssub.s32 %s9, 1
      %p161 = scmp.lt.s32.totalorder %s18, 1
      %s162 = scalar_select %p161, %s18, 1
      %p163 = scmp.lt.s32.totalorder %s19, 0
      %s164 = scalar_select %p163, %s19, 0
      %s165 = sadd.s32 %s164, %s162
      %s166 = smul.addr %s165, 4
      %s167 = scalar_lea.vmem %s0, %s166
      %p168 = pneg %p49
      %p169 = pneg %p46
      %p170 = pneg %p70
      %p171 = pneg %p67
      %p172 = pneg %p91
      %p173 = pneg %p88
      %p174 = pneg %p119
      %p175 = pneg %p116
      %p176 = scmp.lt.s32.totalorder %s18, 1
      %s177 = scalar_select %p176, %s18, 1
      %p178 = scmp.lt.s32.totalorder %s19, 0
      %s179 = scalar_select %p178, %s19, 0
      %s180 = sadd.s32 %s179, %s177
      %s181 = smul.addr %s180, 8
      %s182 = scalar_lea.vmem %s3, %s181
      %p183 = scmp.lt.s32.totalorder %s18, 1
      %s184 = scalar_select %p183, %s18, 1
      %p185 = scmp.lt.s32.totalorder %s19, 0
      %s186 = scalar_select %p185, %s19, 0
      %s187 = sadd.s32 %s186, %s184
      %s188 = smul.addr %s187, 4
      %s189 = scalar_lea.vmem %s0, %s188
      %p190 = scmp.lt.s32.totalorder %s18, 1
      %s191 = scalar_select %p190, %s18, 1
      %p192 = scmp.lt.s32.totalorder %s19, 0
      %s193 = scalar_select %p192, %s19, 0
      %s194 = sadd.s32 %s193, %s191
      %s195 = smul.addr %s194, 8
      %s196 = scalar_lea.vmem %s3, %s195
      %v197 = vld [vmem:[%s189] sm:$0xf]
      %v198 = vunpack.c.l.bf16 %v197
      %v199 = vld [vmem:[%s1] sm:$0xff]
      %201 = vset.pattern.permute.xlu0 0
      %202 = vperm.xlu0 %201, %v199
      %v203 = vpop.permute.xlu0 %202
      %v205 = vmul.f32 %v198, %v203
      %v206 = vld [vmem:[%s2] sm:$0xff]
      %208 = vset.pattern.permute.xlu0 0
      %209 = vperm.xlu0 %208, %v206
      %v210 = vpop.permute.xlu0 %209
      %v212 = vadd.f32 %v205, %v210
      %v213 = vmax.f32 %v212, 0.0
      %214 = vst [vmem:[%s196] sm:$0xff] %v213
      %p215 = scmp.lt.s32.totalorder %s18, 1
      %s216 = scalar_select %p215, %s18, 1
      %p217 = scmp.lt.s32.totalorder %s19, 0
      %s218 = scalar_select %p217, %s19, 0
      %s219 = sadd.s32 %s218, %s216
      %s220 = smul.addr %s219, 8
      %s221 = scalar_lea.vmem %s3, %s220
      // Predicated region
      $region33: #{downsampler_block.3} parent=31 // pred_check
        %p222 = pneg %p116
      $region34: #{downsampler_block.3} parent=31 // pred_check_branch
        %224 = sbr.rel (%p222) target = $region36
      $region35: #{downsampler_block.3} parent=31 // pred_region
        _
      $region36: #{downsampler_block.3} parent=31 // pred_fallthru
        _
    $region32: #{downsampler_block.3} parent=5 // pred_fallthru
      _
    %p225 = scmp.le.s32.totalorder 2, %s9
    // Predicated region
    $region37: #{downsampler_block.3} parent=5 // pred_check
      %p226 = pneg %p225
    $region38: #{downsampler_block.3} parent=5 // pred_check_branch
      %228 = sbr.rel (%p226) target = $region40
    $region39: #{downsampler_block.3} parent=5 // pred_region
      %s229 = ssub.s32 %s9, 2
      // Predicated region
      $region41: #{downsampler_block.3} parent=39 // pred_check
        %p230 = pneg %p122
      $region42: #{downsampler_block.3} parent=39 // pred_check_branch
        %232 = sbr.rel (%p230) target = $region44
      $region43: #{downsampler_block.3} parent=39 // pred_region
        %p233 = scmp.lt.s32.totalorder %s20, 1
        %s234 = scalar_select %p233, %s20, 1
        %p235 = scmp.lt.s32.totalorder %s21, 0
        %s236 = scalar_select %p235, %s21, 0
        %s237 = sadd.s32 %s236, %s234
        %s238 = smul.addr %s237, 8
        %s239 = scalar_lea.vmem %s3, %s238
      $region44: #{downsampler_block.3} parent=39 // pred_fallthru
        _
    $region40: #{downsampler_block.3} parent=5 // pred_fallthru
      _
  $region6: #{downsampler_block.3} parent=0 // loop_footer
    %s13 = sadd.s32 1, %s9
  $region7: #{downsampler_block.3} parent=0 // loop_footer_branch
    %8 = sbr.rel target = $region3
  $region8: #{downsampler_block.3} parent=0 // loop_exit
    _

</llo_original>
